<compile_context>
chip_gen: v7x
topology: tpu7x:2x2x1
jax: 0.10.0
libtpu: 0.0.40
codegen_flags: <defaults>
</compile_context>

<pallas_src>
from functools import partial

import jax
import jax.numpy as jnp
from jax import lax
from jax.experimental import pallas as pl
from jax.experimental.pallas import tpu as pltpu


# ---------------------------------------------------------------------------
# Parameter / buffer construction (plain JAX "module init" glue)
# ---------------------------------------------------------------------------

def _build_pe(d_model: int, max_len: int = 5000) -> jnp.ndarray:
    """Replicates the torch buffer: pe of shape (max_len, 1, d_model), float32."""
    position = jnp.arange(0, max_len, dtype=jnp.float32)[:, None]            # (max_len, 1)
    div_term = jnp.exp(
        jnp.arange(0, d_model, 2, dtype=jnp.float32)
        * (-jnp.log(jnp.float32(10000.0)) / d_model)
    )                                                                         # (d_model//2,)
    angles = position * div_term                                              # (max_len, d//2)
    pe = jnp.zeros((max_len, d_model), dtype=jnp.float32)
    pe = pe.at[:, 0::2].set(jnp.sin(angles))
    pe = pe.at[:, 1::2].set(jnp.cos(angles))
    return pe[:, None, :]                                                     # (max_len, 1, d)


def _choose_tile_s(S: int, B: int, H: int, itemsize: int,
                   target_bytes: int = 2 * 1024 * 1024) -> int:
    """Pick a seq-tile so each (tile, B, H) block is ~2 MiB (review: 1-4 MiB sweet
    spot), double-buffered in+out+pe stays far below the 32 MiB scoped VMEM default
    on v5e/v6e/v7x. Keeps tile a multiple of 8 (or full S) so the pe block's
    second-to-last dim is always legal."""
    if S <= 8:
        return int(S)
    rows = max(8, target_bytes // max(1, B * H * itemsize))
    rows -= rows % 8
    return int(min(rows, S))


# ---------------------------------------------------------------------------
# Kernel 1: standalone positional-encoding add  (x + pe[:S] broadcast over batch)
# ---------------------------------------------------------------------------

def _pe_add_kernel(x_ref, pe_ref, o_ref):
    # x_ref : (T, B, D) tile    pe_ref : (T, D) tile (f32)
    x = x_ref[...].astype(jnp.float32)
    pe = pe_ref[...]
    o_ref[...] = (x + pe[:, None, :]).astype(o_ref.dtype)   # batch broadcast in-kernel


class PositionalEncoding:
    """JAX/Pallas equivalent of the PyTorch PositionalEncoding module."""

    def __init__(self, d_model: int, max_len: int = 5000):
        self.d_model = d_model
        self.max_len = max_len
        self.pe = _build_pe(d_model, max_len)   # (max_len, 1, d_model), float32

    def __call__(self, x: jnp.ndarray) -> jnp.ndarray:
        # x: (seq_len, batch, d_model)
        S, B, D = x.shape
        pe_slice = self.pe[:S, 0, :]                         # (S, D), stays f32 (no per-call cast)
        tile_s = _choose_tile_s(S, B, D, x.dtype.itemsize)
        grid = (pl.cdiv(S, tile_s),)
        bytes_accessed = int(2 * S * B * D * x.dtype.itemsize + S * D * 4)
        return pl.pallas_call(
            _pe_add_kernel,
            out_shape=jax.ShapeDtypeStruct((S, B, D), x.dtype),
            grid=grid,
            in_specs=[
                pl.BlockSpec((tile_s, B, D), lambda i: (i, 0, 0)),
                pl.BlockSpec((tile_s, D), lambda i: (i, 0)),
            ],
            out_specs=pl.BlockSpec((tile_s, B, D), lambda i: (i, 0, 0)),
            compiler_params=pltpu.CompilerParams(dimension_semantics=("parallel",)),
            cost_estimate=pl.CostEstimate(
                flops=int(S * B * D), transcendentals=0, bytes_accessed=bytes_accessed),
        )(x, pe_slice)


# ---------------------------------------------------------------------------
# Kernel 2 (fused hot path of Embeddings): (x + pe) -> LayerNorm, tiled over seq
# ---------------------------------------------------------------------------

def _pe_ln_kernel(x_ref, pe_ref, g_ref, b_ref, o_ref, *, eps):
    # x_ref : (T, B, H)   pe_ref : (T, H) f32   g_ref/b_ref : (1, H)
    x = x_ref[...].astype(jnp.float32)
    pe = pe_ref[...]
    y = x + pe[:, None, :]                                   # batch broadcast in-kernel
    mu = jnp.mean(y, axis=-1, keepdims=True)
    var = jnp.mean(jnp.square(y - mu), axis=-1, keepdims=True)
    yn = (y - mu) * lax.rsqrt(var + eps)
    g = g_ref[...].astype(jnp.float32)[None, :, :]           # (1, 1, H)
    b = b_ref[...].astype(jnp.float32)[None, :, :]
    o_ref[...] = (yn * g + b).astype(o_ref.dtype)


def _fused_pe_layernorm(x, pe_slice, gamma, beta, eps, tile_s):
    S, B, H = x.shape
    grid = (pl.cdiv(S, tile_s),)
    bytes_accessed = int(2 * S * B * H * x.dtype.itemsize + S * H * 4 + 2 * H * 4)
    return pl.pallas_call(
        partial(_pe_ln_kernel, eps=eps),
        out_shape=jax.ShapeDtypeStruct((S, B, H), x.dtype),
        grid=grid,
        in_specs=[
            pl.BlockSpec((tile_s, B, H), lambda i: (i, 0, 0)),   # x tile
            pl.BlockSpec((tile_s, H), lambda i: (i, 0)),         # pe tile (batch-independent)
            pl.BlockSpec((1, H), lambda i: (0, 0)),              # gamma (resident)
            pl.BlockSpec((1, H), lambda i: (0, 0)),              # beta  (resident)
        ],
        out_specs=pl.BlockSpec((tile_s, B, H), lambda i: (i, 0, 0)),
        compiler_params=pltpu.CompilerParams(dimension_semantics=("parallel",)),
        cost_estimate=pl.CostEstimate(
            flops=int(10 * S * B * H), transcendentals=int(S * B),
            bytes_accessed=bytes_accessed),
        input_output_aliases={0: 0},   # x is a jit-internal intermediate; reuse its HBM buffer
    )(x, pe_slice, gamma, beta)


@partial(jax.jit, static_argnames=("eps",))
def _embeddings_forward(input_ids, table, pe, gamma, beta, *, eps):
    S, B = input_ids.shape
    H = table.shape[1]
    # Token-embedding gather (data-dependent HBM gather; handled by XLA).
    # TODO(synk): for very large vocab tables this could be a manual per-row DMA
    # gather kernel fused with the add+LN instead of materializing x in HBM.
    x = jnp.take(table, input_ids.reshape(-1), axis=0).reshape(S, B, H)
    pe_slice = pe[:S, 0, :]                                   # (S, H), f32
    tile_s = _choose_tile_s(S, B, H, x.dtype.itemsize)
    out = _fused_pe_layernorm(x, pe_slice, gamma, beta, eps, tile_s)
    # TODO(synk): training-mode dropout (pltpu.prng_* in-kernel) not implemented;
    # eval-mode dropout is the identity, which is what we return here.
    return out


class EmbeddingsConfig:
    def __init__(self, vocab_size, hidden_size, max_position_embeddings, hidden_dropout_prob):
        self.vocab_size = vocab_size
        self.hidden_size = hidden_size
        self.max_position_embeddings = max_position_embeddings
        self.hidden_dropout_prob = hidden_dropout_prob


class Embeddings:
    """JAX/Pallas equivalent of the PyTorch Embeddings module (eval mode)."""

    def __init__(self, config: EmbeddingsConfig, key):
        # nn.Embedding default init: N(0, 1)
        self.token_embeddings = jax.random.normal(
            key, (config.vocab_size, config.hidden_size), dtype=jnp.float32)
        self.pos = PositionalEncoding(config.hidden_size, config.max_position_embeddings)
        self.ln_gamma = jnp.ones((1, config.hidden_size), dtype=jnp.float32)
        self.ln_beta = jnp.zeros((1, config.hidden_size), dtype=jnp.float32)
        self.ln_eps = 1e-12
        self.dropout_prob = config.hidden_dropout_prob

    def __call__(self, input_ids: jnp.ndarray) -> jnp.ndarray:
        # input_ids: (seq_len, batch) int32  (seq-first, matching the pe buffer layout)
        return _embeddings_forward(
            input_ids, self.token_embeddings, self.pos.pe,
            self.ln_gamma, self.ln_beta, eps=self.ln_eps)


# ---------------------------------------------------------------------------
# Reference (plain JAX) and self-test
# ---------------------------------------------------------------------------

def _reference_embeddings(input_ids, table, pe, gamma, beta, eps):
    S, B = input_ids.shape
    x = table[input_ids]                          # (S, B, H)
    y = x + pe[:S]                                # (S, 1, H) broadcast over batch
    mu = jnp.mean(y, axis=-1, keepdims=True)
    var = jnp.mean((y - mu) ** 2, axis=-1, keepdims=True)
    yn = (y - mu) * lax.rsqrt(var + eps)
    return yn * gamma.reshape(1, 1, -1) + beta.reshape(1, 1, -1)


if __name__ == "__main__":
    cfg = EmbeddingsConfig(vocab_size=50, hidden_size=32,
                           max_position_embeddings=64, hidden_dropout_prob=0.1)
    seq_len, batch = 8, 2

    key = jax.random.PRNGKey(0)
    k_ids, k_tbl, k_x = jax.random.split(key, 3)
    input_ids = jax.random.randint(k_ids, (seq_len, batch), 0, cfg.vocab_size, dtype=jnp.int32)

    module = Embeddings(cfg, k_tbl)

    # Full Embeddings forward (token lookup -> fused PE-add + LayerNorm kernel)
    out = jax.block_until_ready(module(input_ids))
    ref = _reference_embeddings(input_ids, module.token_embeddings, module.pos.pe,
                                module.ln_gamma, module.ln_beta, module.ln_eps)
    assert out.shape == (seq_len, batch, cfg.hidden_size)
    assert jnp.allclose(out, ref, atol=1e-4, rtol=1e-4), "Embeddings mismatch vs reference"

    # Standalone PositionalEncoding kernel check
    x = jax.random.normal(k_x, (seq_len, batch, cfg.hidden_size), dtype=jnp.float32)
    y = jax.block_until_ready(module.pos(x))
    y_ref = x + module.pos.pe[:seq_len]
    assert jnp.allclose(y, y_ref, atol=1e-5, rtol=1e-5), "PositionalEncoding mismatch vs reference"

    print("KERNEL_OK")
</pallas_src>

<mosaic_0001>
module attributes {stable_mosaic.version = 11 : i64} {
  func.func @_pe_ln_kernel(%arg0: i32, %arg1: memref<8x2x32xf32, #tpu.memory_space<vmem>>, %arg2: memref<8x32xf32, #tpu.memory_space<vmem>>, %arg3: memref<1x32xf32, #tpu.memory_space<vmem>>, %arg4: memref<1x32xf32, #tpu.memory_space<vmem>>, %arg5: memref<8x2x32xf32, #tpu.memory_space<vmem>>) attributes {dimension_semantics = [#tpu.dimension_semantics<parallel>], iteration_bounds = array<i64: 1>, scalar_prefetch = 0 : i64, scratch_operands = 0 : i64, tpu.core_type = #tpu.core_type<tc>, window_params = [{transform_indices = @transform_0, window_bounds = array<i64: 8, 2, 32>}, {transform_indices = @transform_1, window_bounds = array<i64: 8, 32>}, {pipeline_mode = #tpu.pipeline_mode<synchronous>, transform_indices = @transform_2, window_bounds = array<i64: 1, 32>}, {pipeline_mode = #tpu.pipeline_mode<synchronous>, transform_indices = @transform_3, window_bounds = array<i64: 1, 32>}, {transform_indices = @transform_4, window_bounds = array<i64: 8, 2, 32>}]} {
    %c0 = arith.constant 0 : index
    %c0_0 = arith.constant 0 : index
    %c0_1 = arith.constant 0 : index
    %0 = vector.load %arg1[%c0, %c0_0, %c0_1] : memref<8x2x32xf32, #tpu.memory_space<vmem>>, vector<8x2x32xf32>
    %c0_2 = arith.constant 0 : index
    %c0_3 = arith.constant 0 : index
    %1 = vector.load %arg2[%c0_2, %c0_3] : memref<8x32xf32, #tpu.memory_space<vmem>>, vector<8x32xf32>
    %2 = vector.shape_cast %1 : vector<8x32xf32> to vector<8x1x32xf32>
    %3 = vector.broadcast %2 : vector<8x1x32xf32> to vector<8x2x32xf32>
    %4 = arith.addf %0, %3 : vector<8x2x32xf32>
    %cst = arith.constant dense<0.000000e+00> : vector<8x2xf32>
    %5 = vector.multi_reduction <add>, %4, %cst [2] : vector<8x2x32xf32> to vector<8x2xf32>
    %6 = vector.shape_cast %5 : vector<8x2xf32> to vector<8x2x1xf32>
    %cst_4 = arith.constant 3.200000e+01 : f32
    %7 = vector.broadcast %cst_4 : f32 to vector<8x2x1xf32>
    %8 = arith.divf %6, %7 : vector<8x2x1xf32>
    %9 = vector.broadcast %8 : vector<8x2x1xf32> to vector<8x2x32xf32>
    %10 = arith.subf %4, %9 : vector<8x2x32xf32>
    %11 = arith.mulf %10, %10 : vector<8x2x32xf32>
    %cst_5 = arith.constant dense<0.000000e+00> : vector<8x2xf32>
    %12 = vector.multi_reduction <add>, %11, %cst_5 [2] : vector<8x2x32xf32> to vector<8x2xf32>
    %13 = vector.shape_cast %12 : vector<8x2xf32> to vector<8x2x1xf32>
    %cst_6 = arith.constant 3.200000e+01 : f32
    %14 = vector.broadcast %cst_6 : f32 to vector<8x2x1xf32>
    %15 = arith.divf %13, %14 : vector<8x2x1xf32>
    %16 = vector.broadcast %8 : vector<8x2x1xf32> to vector<8x2x32xf32>
    %17 = arith.subf %4, %16 : vector<8x2x32xf32>
    %cst_7 = arith.constant 9.99999996E-13 : f32
    %18 = vector.broadcast %cst_7 : f32 to vector<8x2x1xf32>
    %19 = arith.addf %15, %18 : vector<8x2x1xf32>
    %20 = math.rsqrt %19 : vector<8x2x1xf32>
    %21 = vector.broadcast %20 : vector<8x2x1xf32> to vector<8x2x32xf32>
    %22 = arith.mulf %17, %21 : vector<8x2x32xf32>
    %c0_8 = arith.constant 0 : index
    %c0_9 = arith.constant 0 : index
    %23 = vector.load %arg3[%c0_8, %c0_9] : memref<1x32xf32, #tpu.memory_space<vmem>>, vector<1x32xf32>
    %24 = vector.shape_cast %23 : vector<1x32xf32> to vector<1x1x32xf32>
    %c0_10 = arith.constant 0 : index
    %c0_11 = arith.constant 0 : index
    %25 = vector.load %arg4[%c0_10, %c0_11] : memref<1x32xf32, #tpu.memory_space<vmem>>, vector<1x32xf32>
    %26 = vector.shape_cast %25 : vector<1x32xf32> to vector<1x1x32xf32>
    %27 = vector.broadcast %24 : vector<1x1x32xf32> to vector<8x2x32xf32>
    %28 = arith.mulf %22, %27 : vector<8x2x32xf32>
    %29 = vector.broadcast %26 : vector<1x1x32xf32> to vector<8x2x32xf32>
    %30 = arith.addf %28, %29 : vector<8x2x32xf32>
    %c0_12 = arith.constant 0 : index
    %c0_13 = arith.constant 0 : index
    %c0_14 = arith.constant 0 : index
    %31 = vector.load %arg5[%c0_12, %c0_13, %c0_14] : memref<8x2x32xf32, #tpu.memory_space<vmem>>, vector<8x2x32xf32>
    tpu.vector_store %arg5[%c0_12, %c0_13, %c0_14], %30 {strides = array<i32>} : memref<8x2x32xf32, #tpu.memory_space<vmem>>, vector<8x2x32xf32>,
    return
  }
  func.func @transform_0(%arg0: i32) -> (i32, i32, i32) {
    %c0_i32 = arith.constant 0 : i32
    %c0_i32_0 = arith.constant 0 : i32
    %c0_i32_1 = arith.constant 0 : i32
    return %arg0, %c0_i32, %c0_i32_0 : i32, i32, i32
  }
  func.func @transform_1(%arg0: i32) -> (i32, i32) {
    %c0_i32 = arith.constant 0 : i32
    %c0_i32_0 = arith.constant 0 : i32
    return %arg0, %c0_i32 : i32, i32
  }
  func.func @transform_2(%arg0: i32) -> (i32, i32) {
    %c0_i32 = arith.constant 0 : i32
    %c0_i32_0 = arith.constant 0 : i32
    %c0_i32_1 = arith.constant 0 : i32
    return %c0_i32, %c0_i32_0 : i32, i32
  }
  func.func @transform_3(%arg0: i32) -> (i32, i32) {
    %c0_i32 = arith.constant 0 : i32
    %c0_i32_0 = arith.constant 0 : i32
    %c0_i32_1 = arith.constant 0 : i32
    return %c0_i32, %c0_i32_0 : i32, i32
  }
  func.func @transform_4(%arg0: i32) -> (i32, i32, i32) {
    %c0_i32 = arith.constant 0 : i32
    %c0_i32_0 = arith.constant 0 : i32
    %c0_i32_1 = arith.constant 0 : i32
    return %arg0, %c0_i32, %c0_i32_0 : i32, i32, i32
  }
}

</mosaic_0001>

<llo_original>
// kernel: _embeddings_forward.1
$region0: #{_embeddings_forward.1}
  #allocation0 [shape = 'u32[]', space=smem, size = 0x4, offset = 0x4, fixed_abs, tag = 'smem constant byte address 0x4 - core index']
  #allocation1 [shape = 'u32[144,128]{1,0:T(1,128)}', space=vmem, size = 0x12000, scoped, tag = 'internal scratch']
  %s0 = inlined_call_operand.hbm [shape: f32[8,2,32], index: 0, kind: input, shape index: {}, may-alias: {0,4}]
  %s1 = inlined_call_operand.vmem [shape: f32[8,32], index: 1, kind: input, shape index: {}]
  %s2 = inlined_call_operand.vmem [shape: f32[1,32], index: 2, kind: input, shape index: {}]
  %s3 = inlined_call_operand.vmem [shape: f32[1,32], index: 3, kind: input, shape index: {}]
  %s4 = inlined_call_operand.hbm [shape: f32[8,2,32], index: 4, kind: output, shape index: {}, may-alias: {0,4}]
  %s5 = sld [smem:[#allocation0]]
  $region30: #{_embeddings_forward.1} parent=0
    _
  %s7 = ssub.s32 1, %s5
  %s8 = scalar_select 0, %s7, %s5
  $region1: #{_embeddings_forward.1} parent=0
    #allocation2 [shape = 'u8[8192]{0}', space=vmem, size = 0x2000, scoped, tag = 'input window, operand 0, single buffered']
    #allocation3 [shape = 's32[1]{0}', space=sflag, size = 0x4, scoped, tag = 'scoped memory for _embeddings_forward.1']
    #allocation4 [shape = 's32[1]{0}', space=sflag, size = 0x4, scoped, tag = 'scoped memory for _embeddings_forward.1']
    #allocation5 [shape = 'u8[8192]{0}', space=vmem, size = 0x2000, scoped, tag = 'output window, operand 0, single buffered']
    %9 = vsyncpa [#allocation3], 0
    %10 = vsyncpa [#allocation4], 0
    // Predicated region
    $region2: #{_embeddings_forward.1} parent=1 // pred_check
      _
    $region3: #{_embeddings_forward.1} parent=1 // pred_check_branch
      %12 = sbr.rel (0) target = $region5
    $region4: #{_embeddings_forward.1} parent=1 // pred_region
      %s14 = ssub.s32 256, 256
      %15 = vsyncadd [#allocation3], %s14
      %s16 = sshll.u32 [#allocation2], 4
      %s17 = int_to_ptr.vmem [resolvable:$true] %s16
      %22 = dma.hbm_to_vmem [thread:$0]  %s0, 256, %s17, [#allocation3], 32, 32, 2
    $region5: #{_embeddings_forward.1} parent=1 // pred_fallthru
      _
    // Predicated region
    $region6: #{_embeddings_forward.1} parent=1 // pred_check
      _
    $region7: #{_embeddings_forward.1} parent=1 // pred_check_branch
      %24 = sbr.rel (0) target = $region9
    $region8: #{_embeddings_forward.1} parent=1 // pred_region
      _
    $region9: #{_embeddings_forward.1} parent=1 // pred_fallthru
      _
    // Predicated region
    $region10: #{_embeddings_forward.1} parent=1 // pred_check
      _
    $region11: #{_embeddings_forward.1} parent=1 // pred_check_branch
      %26 = sbr.rel (0) target = $region13
    $region12: #{_embeddings_forward.1} parent=1 // pred_region
      _
    $region13: #{_embeddings_forward.1} parent=1 // pred_fallthru
      _
    // Predicated region
    $region14: #{_embeddings_forward.1} parent=1 // pred_check
      _
    $region15: #{_embeddings_forward.1} parent=1 // pred_check_branch
      %28 = sbr.rel (0) target = $region17
    $region16: #{_embeddings_forward.1} parent=1 // pred_region
      _
    $region17: #{_embeddings_forward.1} parent=1 // pred_fallthru
      _
    // Predicated region
    $region18: #{_embeddings_forward.1} parent=1 // pred_check
      _
    $region19: #{_embeddings_forward.1} parent=1 // pred_check_branch
      %30 = sbr.rel (0) target = $region21
    $region20: #{_embeddings_forward.1} parent=1 // pred_region
      %31 = dma.done [#allocation3], 256
    $region21: #{_embeddings_forward.1} parent=1 // pred_fallthru
      _
    %v32 = vld [vmem:[#allocation2] sm:$0x3]
    %v33 = vld [vmem:[#allocation2 + $0x2] sm:$0x3]
    %v34 = vld [vmem:[#allocation2 + $0x4] sm:$0x3]
    %v35 = vld [vmem:[#allocation2 + $0x6] sm:$0x3]
    %v36 = vld [vmem:[#allocation2 + $0x8] sm:$0x3]
    %v37 = vld [vmem:[#allocation2 + $0xa] sm:$0x3]
    %v38 = vld [vmem:[#allocation2 + $0xc] sm:$0x3]
    %v39 = vld [vmem:[#allocation2 + $0xe] sm:$0x3]
    %v40 = vld [vmem:[%s1] sm:$0xff]
    %v42 = vcombine.high %v40, %v40
    %v44 = vunpack.c.l.s4 1966171168
    %v45 = vunpack.c.0.s8 %v44
    %v46 = vlaneseq
    %v47 = vshrl.u32 %v46, 7
    %v48 = vsub.s32 %v45, %v47
    %v49 = vrot.slane %v40, %v48
    %v51 = vunpack.c.l.s4 1966171168
    %v52 = vunpack.c.0.s8 %v51
    %v53 = vlaneseq
    %v54 = vshrl.u32 %v53, 7
    %v55 = vsub.s32 %v52, %v54
    %v56 = vrot.slane %v42, %v55
    %v57 = vcombine.high %v49, %v49
    %v58 = vcombine.high %v56, %v56
    %v60 = vunpack.c.l.s4 1966171168
    %v61 = vunpack.c.0.s8 %v60
    %v62 = vlaneseq
    %v63 = vshrl.u32 %v62, 7
    %v64 = vsub.s32 %v61, %v63
    %v65 = vrot.slane %v49, %v64
    %v67 = vunpack.c.l.s4 1966171168
    %v68 = vunpack.c.0.s8 %v67
    %v69 = vlaneseq
    %v70 = vshrl.u32 %v69, 7
    %v71 = vsub.s32 %v68, %v70
    %v72 = vrot.slane %v56, %v71
    %v74 = vunpack.c.l.s4 1966171168
    %v75 = vunpack.c.0.s8 %v74
    %v76 = vlaneseq
    %v77 = vshrl.u32 %v76, 7
    %v78 = vsub.s32 %v75, %v77
    %v79 = vrot.slane %v57, %v78
    %v81 = vunpack.c.l.s4 1966171168
    %v82 = vunpack.c.0.s8 %v81
    %v83 = vlaneseq
    %v84 = vshrl.u32 %v83, 7
    %v85 = vsub.s32 %v82, %v84
    %v86 = vrot.slane %v58, %v85
    %v87 = vcombine.high %v65, %v65
    %v88 = vcombine.high %v72, %v72
    %v89 = vcombine.high %v79, %v79
    %v90 = vcombine.high %v86, %v86
    %v91 = vlaneseq
    %v92 = vshrl.u32 %v91, 7
    %v93 = vsub.s32 0, %v92
    %v94 = vrot.slane %v65, %v93
    %v95 = vlaneseq
    %v96 = vshrl.u32 %v95, 7
    %v97 = vsub.s32 0, %v96
    %v98 = vrot.slane %v79, %v97
    %v99 = vlaneseq
    %v100 = vshrl.u32 %v99, 7
    %v101 = vsub.s32 0, %v100
    %v102 = vrot.slane %v87, %v101
    %v103 = vlaneseq
    %v104 = vshrl.u32 %v103, 7
    %v105 = vsub.s32 0, %v104
    %v106 = vrot.slane %v89, %v105
    %v107 = vlaneseq
    %v108 = vshrl.u32 %v107, 7
    %v109 = vsub.s32 0, %v108
    %v110 = vrot.slane %v72, %v109
    %v111 = vlaneseq
    %v112 = vshrl.u32 %v111, 7
    %v113 = vsub.s32 0, %v112
    %v114 = vrot.slane %v86, %v113
    %v115 = vlaneseq
    %v116 = vshrl.u32 %v115, 7
    %v117 = vsub.s32 0, %v116
    %v118 = vrot.slane %v88, %v117
    %v119 = vlaneseq
    %v120 = vshrl.u32 %v119, 7
    %v121 = vsub.s32 0, %v120
    %v122 = vrot.slane %v90, %v121
    %v131 = vadd.f32 %v32, %v94
    %v132 = vadd.f32 %v33, %v98
    %v133 = vadd.f32 %v34, %v102
    %v134 = vadd.f32 %v35, %v106
    %v135 = vadd.f32 %v36, %v110
    %v136 = vadd.f32 %v37, %v114
    %v137 = vadd.f32 %v38, %v118
    %v138 = vadd.f32 %v39, %v122
    %vm139 = vcmask 254976
    %v140 = vsel %vm139, %v131, 0.0
    %141 = vadd.xlane.f32.xlu0 %v140
    %v142 = vpop.xlane.xlu0 %141
    %v143 = vsel %vm139, %v132, 0.0
    %144 = vadd.xlane.f32.xlu0 %v143
    %v145 = vpop.xlane.xlu0 %144
    %v146 = vsel %vm139, %v133, 0.0
    %147 = vadd.xlane.f32.xlu0 %v146
    %v148 = vpop.xlane.xlu0 %147
    %v149 = vsel %vm139, %v134, 0.0
    %150 = vadd.xlane.f32.xlu0 %v149
    %v151 = vpop.xlane.xlu0 %150
    %v152 = vsel %vm139, %v135, 0.0
    %153 = vadd.xlane.f32.xlu0 %v152
    %v154 = vpop.xlane.xlu0 %153
    %v155 = vsel %vm139, %v136, 0.0
    %156 = vadd.xlane.f32.xlu0 %v155
    %v157 = vpop.xlane.xlu0 %156
    %v158 = vsel %vm139, %v137, 0.0
    %159 = vadd.xlane.f32.xlu0 %v158
    %v160 = vpop.xlane.xlu0 %159
    %v161 = vsel %vm139, %v138, 0.0
    %162 = vadd.xlane.f32.xlu0 %v161
    %v163 = vpop.xlane.xlu0 %162
    %v164 = vrcp.pop 32.0
    %v165 = vmul.f32 %v142, %v164
    %v166 = vmul.f32 %v145, %v164
    %v167 = vmul.f32 %v148, %v164
    %v168 = vmul.f32 %v151, %v164
    %v169 = vmul.f32 %v154, %v164
    %v170 = vmul.f32 %v157, %v164
    %v171 = vmul.f32 %v160, %v164
    %v172 = vmul.f32 %v163, %v164
    %v173 = vsub.f32 %v131, %v165
    %v174 = vsub.f32 %v132, %v166
    %v175 = vsub.f32 %v133, %v167
    %v176 = vsub.f32 %v134, %v168
    %v177 = vsub.f32 %v135, %v169
    %v178 = vsub.f32 %v136, %v170
    %v179 = vsub.f32 %v137, %v171
    %v180 = vsub.f32 %v138, %v172
    %v181 = vmul.f32 %v173, %v173
    %v182 = vmul.f32 %v174, %v174
    %v183 = vmul.f32 %v175, %v175
    %v184 = vmul.f32 %v176, %v176
    %v185 = vmul.f32 %v177, %v177
    %v186 = vmul.f32 %v178, %v178
    %v187 = vmul.f32 %v179, %v179
    %v188 = vmul.f32 %v180, %v180
    %v189 = vsel %vm139, %v181, 0.0
    %190 = vadd.xlane.f32.xlu0 %v189
    %v191 = vpop.xlane.xlu0 %190
    %v192 = vsel %vm139, %v182, 0.0
    %193 = vadd.xlane.f32.xlu0 %v192
    %v194 = vpop.xlane.xlu0 %193
    %v195 = vsel %vm139, %v183, 0.0
    %196 = vadd.xlane.f32.xlu0 %v195
    %v197 = vpop.xlane.xlu0 %196
    %v198 = vsel %vm139, %v184, 0.0
    %199 = vadd.xlane.f32.xlu0 %v198
    %v200 = vpop.xlane.xlu0 %199
    %v201 = vsel %vm139, %v185, 0.0
    %202 = vadd.xlane.f32.xlu0 %v201
    %v203 = vpop.xlane.xlu0 %202
    %v204 = vsel %vm139, %v186, 0.0
    %205 = vadd.xlane.f32.xlu0 %v204
    %v206 = vpop.xlane.xlu0 %205
    %v207 = vsel %vm139, %v187, 0.0
    %208 = vadd.xlane.f32.xlu0 %v207
    %v209 = vpop.xlane.xlu0 %208
    %v210 = vsel %vm139, %v188, 0.0
    %211 = vadd.xlane.f32.xlu0 %v210
    %v212 = vpop.xlane.xlu0 %211
    %v213 = vmul.f32 %v191, %v164
    %v214 = vmul.f32 %v194, %v164
    %v215 = vmul.f32 %v197, %v164
    %v216 = vmul.f32 %v200, %v164
    %v217 = vmul.f32 %v203, %v164
    %v218 = vmul.f32 %v206, %v164
    %v219 = vmul.f32 %v209, %v164
    %v220 = vmul.f32 %v212, %v164
    %v221 = vadd.f32 %v213, 1e-12
    %v222 = vadd.f32 %v214, 1e-12
    %v223 = vadd.f32 %v215, 1e-12
    %v224 = vadd.f32 %v216, 1e-12
    %v225 = vadd.f32 %v217, 1e-12
    %v226 = vadd.f32 %v218, 1e-12
    %v227 = vadd.f32 %v219, 1e-12
    %v228 = vadd.f32 %v220, 1e-12
    %v229 = vrsqrt.pop %v221
    %v230 = vrsqrt.pop %v222
    %v231 = vrsqrt.pop %v223
    %v232 = vrsqrt.pop %v224
    %v233 = vrsqrt.pop %v225
    %v234 = vrsqrt.pop %v226
    %v235 = vrsqrt.pop %v227
    %v236 = vrsqrt.pop %v228
    %v237 = vmul.f32 %v173, %v229
    %v238 = vmul.f32 %v174, %v230
    %v239 = vmul.f32 %v175, %v231
    %v240 = vmul.f32 %v176, %v232
    %v241 = vmul.f32 %v177, %v233
    %v242 = vmul.f32 %v178, %v234
    %v243 = vmul.f32 %v179, %v235
    %v244 = vmul.f32 %v180, %v236
    %v245 = vld [vmem:[%s2] sm:$0x1]
    %v246 = vld [vmem:[%s3] sm:$0x1]
    %v248 = vlaneseq
    %v249 = vshrl.u32 %v248, 7
    %v250 = vsub.s32 0, %v249
    %v251 = vrot.slane %v245, %v250
    %v253 = vmul.f32 %v237, %v251
    %v254 = vmul.f32 %v238, %v251
    %v255 = vmul.f32 %v239, %v251
    %v256 = vmul.f32 %v240, %v251
    %v257 = vmul.f32 %v241, %v251
    %v258 = vmul.f32 %v242, %v251
    %v259 = vmul.f32 %v243, %v251
    %v260 = vmul.f32 %v244, %v251
    %v262 = vlaneseq
    %v263 = vshrl.u32 %v262, 7
    %v264 = vsub.s32 0, %v263
    %v265 = vrot.slane %v246, %v264
    %v267 = vadd.f32 %v253, %v265
    %v268 = vadd.f32 %v254, %v265
    %v269 = vadd.f32 %v255, %v265
    %v270 = vadd.f32 %v256, %v265
    %v271 = vadd.f32 %v257, %v265
    %v272 = vadd.f32 %v258, %v265
    %v273 = vadd.f32 %v259, %v265
    %v274 = vadd.f32 %v260, %v265
    %275 = vst.msk [vmem:[#allocation5] sm:$0x3] %vm139, %v267
    %276 = vst.msk [vmem:[#allocation5 + $0x2] sm:$0x3] %vm139, %v268
    %277 = vst.msk [vmem:[#allocation5 + $0x4] sm:$0x3] %vm139, %v269
    %278 = vst.msk [vmem:[#allocation5 + $0x6] sm:$0x3] %vm139, %v270
    %279 = vst.msk [vmem:[#allocation5 + $0x8] sm:$0x3] %vm139, %v271
    %280 = vst.msk [vmem:[#allocation5 + $0xa] sm:$0x3] %vm139, %v272
    %281 = vst.msk [vmem:[#allocation5 + $0xc] sm:$0x3] %vm139, %v273
    %282 = vst.msk [vmem:[#allocation5 + $0xe] sm:$0x3] %vm139, %v274
    // Predicated region
    $region22: #{_embeddings_forward.1} parent=1 // pred_check
      _
    $region23: #{_embeddings_forward.1} parent=1 // pred_check_branch
      %284 = sbr.rel (0) target = $region25
    $region24: #{_embeddings_forward.1} parent=1 // pred_region
      %s286 = ssub.s32 256, 256
      %287 = vsyncadd [#allocation4], %s286
      %s288 = sshll.u32 [#allocation5], 4
      %s289 = int_to_ptr.vmem [resolvable:$true] %s288
      %294 = dma.vmem_to_hbm [thread:$0]  %s289, 256, %s4, [#allocation4], 32, 32, 2
    $region25: #{_embeddings_forward.1} parent=1 // pred_fallthru
      _
    // Predicated region
    $region26: #{_embeddings_forward.1} parent=1 // pred_check
      _
    $region27: #{_embeddings_forward.1} parent=1 // pred_check_branch
      %296 = sbr.rel (0) target = $region29
    $region28: #{_embeddings_forward.1} parent=1 // pred_region
      %297 = dma.done [#allocation4], 256
    $region29: #{_embeddings_forward.1} parent=1 // pred_fallthru
      _
    %298 = vsyncpa [#allocation3], 1
    %299 = vsyncpa [#allocation4], 1

</llo_original>
